<compile_context>
chip_gen: v7x
topology: tpu7x:2x2x1
jax: 0.10.0
libtpu: 0.0.40
codegen_flags: <defaults>
</compile_context>

<pallas_src>
import math
from typing import NamedTuple

import jax
import jax.numpy as jnp
from jax.experimental import pallas as pl
from jax.experimental.pallas import tpu as pltpu


def _round_up(x: int, m: int) -> int:
    return (x + m - 1) // m * m


def _vmem_cap_bytes() -> int:
    """Physical VMEM per TensorCore; conservative (v7x) fallback."""
    try:
        info = pltpu.get_tpu_info()
        cap = getattr(info, "vmem_capacity_bytes", None)
        if cap:
            return int(cap)
    except Exception:
        pass
    return 64 * 1024 * 1024


class PreparedLoRAWeights(NamedTuple):
    worg_t: jax.Array       # (Kp, Np) compute dtype (merged if merged=True)
    bias: jax.Array         # (1, Np)  f32
    wdown_t: jax.Array      # (Kp, rp) compute dtype
    wup_t: jax.Array        # (rp, Np) compute dtype, scale pre-folded
    n_out: int              # true N
    k_in: int               # true K
    tn: int                 # N tile size
    tk: int                 # K tile size
    compute_dtype: jnp.dtype
    merged: bool


def prepare_lora_weights(w_org, b_org, w_down, w_up, scale, *,
                         compute_dtype=jnp.bfloat16, tn=256, tk=2048,
                         merge_weights=False):
    """One-time weight preparation (do NOT call per forward).

    w_org: [N, K]; b_org: [N]; w_down: [r, K]; w_up: [N, r].
    """
    assert tn % 128 == 0
    N, K = w_org.shape
    r = w_down.shape[0]
    rp = max(_round_up(r, 128), 128)

    # N padding: lane-dense output (>=128 lanes), tiled at tn when large.
    Np = _round_up(N, 128)
    if Np <= tn:
        tn_eff = Np
    else:
        tn_eff = tn
        Np = _round_up(N, tn_eff)

    # K tiling: single full-dim block when K fits, else evenly-spread tiles
    # that are multiples of 128 (padding folded into the weights once here).
    if K <= tk:
        tk_eff, Kp = K, K
    else:
        n_k = -(-K // tk)
        tk_eff = _round_up(-(-K // n_k), 128)
        Kp = n_k * tk_eff

    worg_t = jnp.transpose(w_org).astype(jnp.float32)                 # (K, N)
    wdown_t = jnp.transpose(w_down).astype(jnp.float32)               # (K, r)
    wup_t = jnp.transpose(w_up).astype(jnp.float32) * jnp.float32(scale)  # (r, N)
    bias = b_org.reshape(1, N).astype(jnp.float32)                    # (1, N)

    if merge_weights:
        # Inference fast path: fold the LoRA delta into the base weight (f32).
        worg_t = worg_t + wdown_t @ wup_t

    def pad2(a, rows, cols):
        return jnp.pad(a, ((0, rows - a.shape[0]), (0, cols - a.shape[1])))

    worg_t = pad2(worg_t, Kp, Np).astype(compute_dtype)
    wdown_t = pad2(wdown_t, Kp, rp).astype(compute_dtype)
    wup_t = pad2(wup_t, rp, Np).astype(compute_dtype)
    bias = pad2(bias, 1, Np)

    return PreparedLoRAWeights(worg_t=worg_t, bias=bias, wdown_t=wdown_t,
                               wup_t=wup_t, n_out=N, k_in=K, tn=tn_eff,
                               tk=tk_eff, compute_dtype=compute_dtype,
                               merged=merge_weights)


# --------------------------------------------------------------------------
# Kernels
# --------------------------------------------------------------------------

def _lora_down_kernel(x_ref, wdown_ref, down_ref, acc_ref):
    """down = x @ W_down^T, computed once per M tile (grid: (Mi, Kk))."""
    k = pl.program_id(1)

    @pl.when(k == 0)
    def _():
        acc_ref[...] = jnp.zeros_like(acc_ref)

    x = x_ref[...].astype(wdown_ref.dtype)          # in-kernel cast to bf16
    acc_ref[...] += jnp.dot(x, wdown_ref[...],
                            preferred_element_type=jnp.float32)

    @pl.when(k == pl.num_programs(1) - 1)
    def _():
        down_ref[...] = acc_ref[...].astype(down_ref.dtype)


def _lora_matmul_kernel(x_ref, worg_ref, bias_ref, down_ref, wup_ref,
                        o_ref, acc_ref):
    """y = x @ W_org^T + bias + down @ (scale*W_up^T); grid: (Mi, Nj, Kk)."""
    k = pl.program_id(2)

    @pl.when(k == 0)
    def _():
        acc_ref[...] = jnp.zeros_like(acc_ref)

    x = x_ref[...].astype(worg_ref.dtype)           # in-kernel cast to bf16
    acc_ref[...] += jnp.dot(x, worg_ref[...],
                            preferred_element_type=jnp.float32)

    @pl.when(k == pl.num_programs(2) - 1)
    def _():
        acc = acc_ref[...] + bias_ref[...]
        acc = acc + jnp.dot(down_ref[...], wup_ref[...],
                            preferred_element_type=jnp.float32)
        o_ref[...] = acc.astype(o_ref.dtype)


def _merged_linear_kernel(x_ref, w_ref, bias_ref, o_ref, acc_ref):
    """y = x @ W_merged^T + bias (inference fast path); grid: (Mi, Nj, Kk)."""
    k = pl.program_id(2)

    @pl.when(k == 0)
    def _():
        acc_ref[...] = jnp.zeros_like(acc_ref)

    x = x_ref[...].astype(w_ref.dtype)
    acc_ref[...] += jnp.dot(x, w_ref[...], preferred_element_type=jnp.float32)

    @pl.when(k == pl.num_programs(2) - 1)
    def _():
        o_ref[...] = (acc_ref[...] + bias_ref[...]).astype(o_ref.dtype)


# --------------------------------------------------------------------------
# Wrapper
# --------------------------------------------------------------------------

def lora_linear_forward(x, prepared: PreparedLoRAWeights, *, tm=None,
                        out_dtype=None):
    """x: [..., K] -> [..., N]."""
    orig_shape = x.shape
    K = orig_shape[-1]
    assert K == prepared.k_in, f"expected K={prepared.k_in}, got {K}"
    if out_dtype is None:
        out_dtype = x.dtype        # pass jnp.bfloat16 to halve store traffic

    cap = _vmem_cap_bytes()
    budget = (cap // 4) * 3        # never request the full physical VMEM
    if tm is None:
        # Big-VMEM chips (v5e/v6e: 128 MiB) -> bigger M tile halves weight
        # re-streaming; v7x (64 MiB) keeps 256.
        tm = 512 if cap >= (100 << 20) else 256

    Kp, Np = prepared.worg_t.shape
    rp = prepared.wdown_t.shape[1]
    tn, tk = prepared.tn, prepared.tk
    cdt = prepared.compute_dtype

    x2 = x.reshape(-1, K)
    M = x2.shape[0]

    # Ragged-M: spread padding evenly, align to 16 (bf16 sublane packing).
    n_m = -(-M // tm)
    tm_eff = min(tm, _round_up(-(-M // n_m), 16))
    Mp = n_m * tm_eff
    if Mp != M or Kp != K:
        x2 = jnp.pad(x2, ((0, Mp - M), (0, Kp - K)))

    xb = x2.dtype.itemsize
    wb = jnp.dtype(cdt).itemsize
    ob = jnp.dtype(out_dtype).itemsize
    n_k = Kp // tk
    headroom = 16 << 20

    if not prepared.merged:
        # ---- LoRA down projection: down = x @ W_down^T  (once per M tile) --
        down_vmem = 2 * (tm_eff * tk * xb + tk * rp * wb + tm_eff * rp * wb) \
            + tm_eff * rp * 4
        down = pl.pallas_call(
            _lora_down_kernel,
            out_shape=jax.ShapeDtypeStruct((Mp, rp), cdt),
            grid_spec=pltpu.PrefetchScalarGridSpec(
                num_scalar_prefetch=0,
                grid=(Mp // tm_eff, n_k),
                in_specs=[
                    pl.BlockSpec((tm_eff, tk), lambda i, k: (i, k)),   # x
                    pl.BlockSpec((tk, rp), lambda i, k: (k, 0)),       # W_down^T
                ],
                out_specs=pl.BlockSpec((tm_eff, rp), lambda i, k: (i, 0)),
                scratch_shapes=[pltpu.VMEM((tm_eff, rp), jnp.float32)],
            ),
            compiler_params=pltpu.CompilerParams(
                dimension_semantics=("parallel", "arbitrary"),
                vmem_limit_bytes=min(down_vmem + headroom, budget),
            ),
        )(x2, prepared.wdown_t)

        # ---- main GEMM + bias + LoRA up projection -------------------------
        main_vmem = 2 * (tm_eff * tk * xb + tk * tn * wb + 8 * tn * 4
                         + tm_eff * rp * wb + rp * tn * wb
                         + tm_eff * tn * ob) + tm_eff * tn * 4
        out2 = pl.pallas_call(
            _lora_matmul_kernel,
            out_shape=jax.ShapeDtypeStruct((Mp, Np), out_dtype),
            grid_spec=pltpu.PrefetchScalarGridSpec(
                num_scalar_prefetch=0,
                grid=(Mp // tm_eff, Np // tn, n_k),
                in_specs=[
                    pl.BlockSpec((tm_eff, tk), lambda i, j, k: (i, k)),  # x
                    pl.BlockSpec((tk, tn), lambda i, j, k: (k, j)),      # W_org^T
                    pl.BlockSpec((1, tn), lambda i, j, k: (0, j)),       # bias
                    pl.BlockSpec((tm_eff, rp), lambda i, j, k: (i, 0)),  # down
                    pl.BlockSpec((rp, tn), lambda i, j, k: (0, j)),      # W_up^T
                ],
                out_specs=pl.BlockSpec((tm_eff, tn), lambda i, j, k: (i, j)),
                scratch_shapes=[pltpu.VMEM((tm_eff, tn), jnp.float32)],
            ),
            compiler_params=pltpu.CompilerParams(
                dimension_semantics=("parallel", "parallel", "arbitrary"),
                vmem_limit_bytes=min(main_vmem + headroom, budget),
            ),
        )(x2, prepared.worg_t, prepared.bias, down, prepared.wup_t)
    else:
        # ---- merged-weight inference fast path: single GEMM + bias ---------
        main_vmem = 2 * (tm_eff * tk * xb + tk * tn * wb + 8 * tn * 4
                         + tm_eff * tn * ob) + tm_eff * tn * 4
        out2 = pl.pallas_call(
            _merged_linear_kernel,
            out_shape=jax.ShapeDtypeStruct((Mp, Np), out_dtype),
            grid_spec=pltpu.PrefetchScalarGridSpec(
                num_scalar_prefetch=0,
                grid=(Mp // tm_eff, Np // tn, n_k),
                in_specs=[
                    pl.BlockSpec((tm_eff, tk), lambda i, j, k: (i, k)),  # x
                    pl.BlockSpec((tk, tn), lambda i, j, k: (k, j)),      # W_merged^T
                    pl.BlockSpec((1, tn), lambda i, j, k: (0, j)),       # bias
                ],
                out_specs=pl.BlockSpec((tm_eff, tn), lambda i, j, k: (i, j)),
                scratch_shapes=[pltpu.VMEM((tm_eff, tn), jnp.float32)],
            ),
            compiler_params=pltpu.CompilerParams(
                dimension_semantics=("parallel", "parallel", "arbitrary"),
                vmem_limit_bytes=min(main_vmem + headroom, budget),
            ),
        )(x2, prepared.worg_t, prepared.bias)

    out2 = out2[:M, :prepared.n_out]
    return out2.reshape(*orig_shape[:-1], prepared.n_out)


if __name__ == "__main__":
    # Small shapes consistent with the module.
    batch, seq = 2, 8
    in_features, out_features = 32, 32
    lora_dim, alpha = 4, 1
    scale = alpha / lora_dim

    key = jax.random.PRNGKey(0)
    kx, korg_w, korg_b, kdown, kup = jax.random.split(key, 5)

    # Deterministic init mirroring the module:
    #  - org Linear: uniform(-1/sqrt(K), 1/sqrt(K)) for weight and bias
    #  - lora_down: kaiming_uniform(a=sqrt(5)) -> uniform(-1/sqrt(K), 1/sqrt(K))
    #  - lora_up: zeros (module default); also test a nonzero "trained" one.
    bound = 1.0 / math.sqrt(in_features)
    w_org = jax.random.uniform(korg_w, (out_features, in_features),
                               jnp.float32, -bound, bound)
    b_org = jax.random.uniform(korg_b, (out_features,),
                               jnp.float32, -bound, bound)
    w_down = jax.random.uniform(kdown, (lora_dim, in_features),
                                jnp.float32, -bound, bound)
    w_up_init = jnp.zeros((out_features, lora_dim), jnp.float32)
    w_up_trained = jax.random.uniform(kup, (out_features, lora_dim),
                                      jnp.float32, -bound, bound)

    x = jax.random.normal(kx, (batch, seq, in_features), jnp.float32)

    for w_up in (w_up_init, w_up_trained):
        ref = (x @ w_org.T + b_org) + ((x @ w_down.T) @ w_up.T) * scale
        for merge in (False, True):
            prepared = prepare_lora_weights(w_org, b_org, w_down, w_up, scale,
                                            merge_weights=merge)
            out = lora_linear_forward(x, prepared)
            out = jax.block_until_ready(out)

            assert out.shape == (batch, seq, out_features)
            # bf16 inputs / f32 accumulation -> relaxed tolerance vs f32 ref.
            err = float(jnp.max(jnp.abs(out.astype(jnp.float32) - ref)))
            assert err < 5e-2, f"merge={merge}: max abs error {err}"

    print("KERNEL_OK")
</pallas_src>

<mosaic_0001>
module attributes {stable_mosaic.version = 11 : i64} {
  func.func @_lora_down_kernel(%arg0: i32, %arg1: i32, %arg2: memref<16x32xf32, #tpu.memory_space<vmem>>, %arg3: memref<32x128xbf16, #tpu.memory_space<vmem>>, %arg4: memref<16x128xbf16, #tpu.memory_space<vmem>>, %arg5: memref<16x128xf32, #tpu.memory_space<vmem>>) attributes {dimension_semantics = [#tpu.dimension_semantics<parallel>, #tpu.dimension_semantics<arbitrary>], iteration_bounds = array<i64: 1, 1>, scalar_prefetch = 0 : i64, scratch_operands = 1 : i64, tpu.core_type = #tpu.core_type<tc>, window_params = [{transform_indices = @transform_0, window_bounds = array<i64: 16, 32>}, {transform_indices = @transform_1, window_bounds = array<i64: 32, 128>}, {transform_indices = @transform_2, window_bounds = array<i64: 16, 128>}]} {
    %c0_i32 = arith.constant 0 : i32
    %0 = arith.cmpi eq, %arg1, %c0_i32 : i32
    %1 = arith.extui %0 : i1 to i32
    %c0_i32_0 = arith.constant 0 : i32
    %2 = arith.cmpi ne, %1, %c0_i32_0 : i32
    scf.if %2 {
      %cst_10 = arith.constant 0.000000e+00 : f32
      %13 = vector.broadcast %cst_10 : f32 to vector<16x128xf32>
      %c0_11 = arith.constant 0 : index
      %c0_12 = arith.constant 0 : index
      %14 = vector.load %arg5[%c0_11, %c0_12] : memref<16x128xf32, #tpu.memory_space<vmem>>, vector<16x128xf32>
      tpu.vector_store %arg5[%c0_11, %c0_12], %13 {strides = array<i32>} : memref<16x128xf32, #tpu.memory_space<vmem>>, vector<16x128xf32>,
    } else {
    }
    %c0 = arith.constant 0 : index
    %c0_1 = arith.constant 0 : index
    %3 = vector.load %arg2[%c0, %c0_1] : memref<16x32xf32, #tpu.memory_space<vmem>>, vector<16x32xf32>
    %4 = arith.truncf %3 : vector<16x32xf32> to vector<16x32xbf16>
    %c0_2 = arith.constant 0 : index
    %c0_3 = arith.constant 0 : index
    %5 = vector.load %arg5[%c0_2, %c0_3] : memref<16x128xf32, #tpu.memory_space<vmem>>, vector<16x128xf32>
    %c0_4 = arith.constant 0 : index
    %c0_5 = arith.constant 0 : index
    %6 = vector.load %arg3[%c0_4, %c0_5] : memref<32x128xbf16, #tpu.memory_space<vmem>>, vector<32x128xbf16>
    %cst = arith.constant dense<0.000000e+00> : vector<16x128xf32>
    %7 = tpu.matmul %4, %6, %cst {dimension_numbers = #tpu.dot_dimension_numbers<[1], [0], [0], [1], [0, 0, 1, 1], [], []>} : vector<16x32xbf16>, vector<32x128xbf16>, vector<16x128xf32> -> vector<16x128xf32>
    %8 = arith.addf %5, %7 : vector<16x128xf32>
    %c0_6 = arith.constant 0 : index
    %c0_7 = arith.constant 0 : index
    %9 = vector.load %arg5[%c0_6, %c0_7] : memref<16x128xf32, #tpu.memory_space<vmem>>, vector<16x128xf32>
    tpu.vector_store %arg5[%c0_6, %c0_7], %8 {strides = array<i32>} : memref<16x128xf32, #tpu.memory_space<vmem>>, vector<16x128xf32>,
    %c0_i32_8 = arith.constant 0 : i32
    %10 = arith.cmpi eq, %arg1, %c0_i32_8 : i32
    %11 = arith.extui %10 : i1 to i32
    %c0_i32_9 = arith.constant 0 : i32
    %12 = arith.cmpi ne, %11, %c0_i32_9 : i32
    scf.if %12 {
      %c0_10 = arith.constant 0 : index
      %c0_11 = arith.constant 0 : index
      %13 = vector.load %arg5[%c0_10, %c0_11] : memref<16x128xf32, #tpu.memory_space<vmem>>, vector<16x128xf32>
      %14 = arith.truncf %13 : vector<16x128xf32> to vector<16x128xbf16>
      %c0_12 = arith.constant 0 : index
      %c0_13 = arith.constant 0 : index
      %15 = vector.load %arg4[%c0_12, %c0_13] : memref<16x128xbf16, #tpu.memory_space<vmem>>, vector<16x128xbf16>
      tpu.vector_store %arg4[%c0_12, %c0_13], %14 {strides = array<i32>} : memref<16x128xbf16, #tpu.memory_space<vmem>>, vector<16x128xbf16>,
    } else {
    }
    return
  }
  func.func @transform_0(%arg0: i32, %arg1: i32) -> (i32, i32) {
    %c0_i32 = arith.constant 0 : i32
    return %arg0, %arg1 : i32, i32
  }
  func.func @transform_1(%arg0: i32, %arg1: i32) -> (i32, i32) {
    %c0_i32 = arith.constant 0 : i32
    %c0_i32_0 = arith.constant 0 : i32
    return %arg1, %c0_i32 : i32, i32
  }
  func.func @transform_2(%arg0: i32, %arg1: i32) -> (i32, i32) {
    %c0_i32 = arith.constant 0 : i32
    %c0_i32_0 = arith.constant 0 : i32
    return %arg0, %c0_i32 : i32, i32
  }
}

</mosaic_0001>

<llo_original>
// kernel: tpu_custom_call.1
$region0: #{tpu_custom_call.1}
  #allocation0 [shape = 'u32[]', space=smem, size = 0x4, offset = 0x4, fixed_abs, tag = 'smem constant byte address 0x4 - core index']
  #allocation1 [shape = 'u32[144,128]{1,0:T(1,128)}', space=vmem, size = 0x12000, scoped, tag = 'internal scratch']
  #allocation2 [shape = 'f32[16,128]{1,0:T(8,128)}', space=vmem, size = 0x2000, scoped, tag = 'scratch operand']
  %s0 = inlined_call_operand.hbm [shape: f32[16,32], index: 0, kind: input, shape index: {}]
  %s1 = inlined_call_operand.hbm [shape: bf16[32,128], index: 1, kind: input, shape index: {}]
  %s2 = inlined_call_operand.hbm [shape: bf16[16,128], index: 2, kind: output, shape index: {}]
  %s3 = sld [smem:[#allocation0]]
  $region34: #{tpu_custom_call.1} parent=0
    _
  %s5 = ssub.s32 1, %s3
  %s6 = scalar_select 0, %s5, %s3
  $region1: #{tpu_custom_call.1} parent=0
    #allocation3 [shape = 'u8[8192]{0}', space=vmem, size = 0x2000, scoped, tag = 'input window, operand 0, single buffered']
    #allocation4 [shape = 's32[1]{0}', space=sflag, size = 0x4, scoped, tag = 'scoped memory for tpu_custom_call.1']
    #allocation5 [shape = 's32[1]{0}', space=sflag, size = 0x4, scoped, tag = 'scoped memory for tpu_custom_call.1']
    #allocation6 [shape = 'u8[8192]{0}', space=vmem, size = 0x2000, scoped, tag = 'input window, operand 1, single buffered']
    #allocation7 [shape = 's32[1]{0}', space=sflag, size = 0x4, scoped, tag = 'scoped memory for tpu_custom_call.1']
    #allocation8 [shape = 'u8[4096]{0}', space=vmem, size = 0x1000, scoped, tag = 'output window, operand 0, single buffered']
    %7 = vsyncpa [#allocation4], 0
    %8 = vsyncpa [#allocation7], 0
    %9 = vsyncpa [#allocation5], 0
    // Predicated region
    $region2: #{tpu_custom_call.1} parent=1 // pred_check
      _
    $region3: #{tpu_custom_call.1} parent=1 // pred_check_branch
      %11 = sbr.rel (0) target = $region5
    $region4: #{tpu_custom_call.1} parent=1 // pred_region
      %s13 = ssub.s32 256, 256
      %14 = vsyncadd [#allocation4], %s13
      %s15 = sshll.u32 [#allocation3], 4
      %s16 = int_to_ptr.vmem [resolvable:$true] %s15
      %21 = dma.hbm_to_vmem [thread:$0]  %s0, 256, %s16, [#allocation4], 128, 128, 8
    $region5: #{tpu_custom_call.1} parent=1 // pred_fallthru
      _
    // Predicated region
    $region6: #{tpu_custom_call.1} parent=1 // pred_check
      _
    $region7: #{tpu_custom_call.1} parent=1 // pred_check_branch
      %23 = sbr.rel (0) target = $region9
    $region8: #{tpu_custom_call.1} parent=1 // pred_region
      %s25 = ssub.s32 256, 256
      %26 = vsyncadd [#allocation7], %s25
      %s27 = sshll.u32 [#allocation6], 4
      %s28 = int_to_ptr.vmem [resolvable:$true] %s27
      %33 = dma.hbm_to_vmem [thread:$0]  %s1, 256, %s28, [#allocation7], 64, 64, 4
    $region9: #{tpu_custom_call.1} parent=1 // pred_fallthru
      _
    // Predicated region
    $region10: #{tpu_custom_call.1} parent=1 // pred_check
      _
    $region11: #{tpu_custom_call.1} parent=1 // pred_check_branch
      %35 = sbr.rel (0) target = $region13
    $region12: #{tpu_custom_call.1} parent=1 // pred_region
      %36 = dma.done [#allocation4], 256
    $region13: #{tpu_custom_call.1} parent=1 // pred_fallthru
      _
    // Predicated region
    $region14: #{tpu_custom_call.1} parent=1 // pred_check
      _
    $region15: #{tpu_custom_call.1} parent=1 // pred_check_branch
      %38 = sbr.rel (0) target = $region17
    $region16: #{tpu_custom_call.1} parent=1 // pred_region
      %39 = dma.done [#allocation7], 256
    $region17: #{tpu_custom_call.1} parent=1 // pred_fallthru
      _
    %p41 = scmp.eq.s32.totalorder 0, 0
    // Predicated region
    $region18: #{tpu_custom_call.1} parent=1 // pred_check
      %p42 = pneg %p41
    $region19: #{tpu_custom_call.1} parent=1 // pred_check_branch
      %44 = sbr.rel (%p42) target = $region21
    $region20: #{tpu_custom_call.1} parent=1 // pred_region
      %45 = vst [vmem:[#allocation2] sm:$0xff] 0.0
      %46 = vst [vmem:[#allocation2 + $0x8] sm:$0xff] 0.0
    $region21: #{tpu_custom_call.1} parent=1 // pred_fallthru
      _
    %v47 = vld [vmem:[#allocation3] sm:$0xff]
    %v48 = vld [vmem:[#allocation3 + $0x8] sm:$0xff]
    %v49 = vpack.c.bf16 %v48, %v47
    %v50 = vld [vmem:[#allocation2] sm:$0xff]
    %v51 = vld [vmem:[#allocation2 + $0x8] sm:$0xff]
    %v52 = vld [vmem:[#allocation6] sm:$0xf]
    %v53 = vld [vmem:[#allocation6 + $0x4] sm:$0xf]
    %v54 = vld [vmem:[#allocation6 + $0x8] sm:$0xf]
    %v55 = vld [vmem:[#allocation6 + $0xc] sm:$0xf]
    %v60 = vunpack.c.l.b16 %v52
    %v61 = vunpack.c.l.b16 %v53
    %v62 = vunpack.c.l.b16 %v54
    %v63 = vunpack.c.l.b16 %v55
    %v64 = vpack.c.b16 %v61, %v60
    %v65 = vpack.c.b16 %v63, %v62
    %vm68 = vcmask 261120
    %v70 = vsel %vm68, %v49, 0
    %72 = vmatprep.subr.bf16.mxu0 0
    %73 = vmatpush1.bf16.msra.mxu0 %v64
    %74 = vmatprep.subr.bf16.mxu0 0
    %75 = vmatpush1.bf16.msra.mxu0 %v65
    %76 = vmatprep.subr.bf16.mxu0 0
    %77 = vmatpush1.bf16.msra.mxu0 0
    %78 = vmatprep.subr.bf16.mxu0 0
    %79 = vmatpush1.bf16.msra.mxu0 0
    %80 = vmatprep.subr.bf16.mxu0 0
    %81 = vmatpush1.bf16.msra.mxu0 0
    %82 = vmatprep.subr.bf16.mxu0 0
    %83 = vmatpush1.bf16.msra.mxu0 0
    %84 = vmatprep.subr.bf16.mxu0 0
    %85 = vmatpush1.bf16.msra.mxu0 0
    %86 = vmatprep.subr.bf16.mxu0 0
    %87 = vmatpush1.bf16.msra.mxu0 0
    %88 = vmatprep.subr.bf16.mxu0 0
    %89 = vmatpush1.bf16.msra.mxu0 0
    %90 = vmatprep.subr.bf16.mxu0 0
    %91 = vmatpush1.bf16.msra.mxu0 0
    %92 = vmatprep.subr.bf16.mxu0 0
    %93 = vmatpush1.bf16.msra.mxu0 0
    %94 = vmatprep.subr.bf16.mxu0 0
    %95 = vmatpush1.bf16.msra.mxu0 0
    %96 = vmatprep.subr.bf16.mxu0 0
    %97 = vmatpush1.bf16.msra.mxu0 0
    %98 = vmatprep.subr.bf16.mxu0 0
    %99 = vmatpush1.bf16.msra.mxu0 0
    %100 = vmatprep.subr.bf16.mxu0 0
    %101 = vmatpush1.bf16.msra.mxu0 0
    %102 = vmatprep.subr.bf16.mxu0 0
    %103 = vmatpush1.bf16.msra.mxu0 0
    %104 = vmatprep.mubr.bf16.mxu0 0
    %105 = vmatmul.mubr.bf16.gmra.mrb[0].mxu0 %v70
    %v106 = vpop.f32.mrb[0].mxu0
    %v107 = vadd.f32 0.0, %v106
    %v108 = vpop.f32.mrb[0].mxu0
    %v109 = vpop.f32.mrb[0].mxu0
    %v110 = vadd.f32 0.0, %v109
    %v111 = vpop.f32.mrb[0].mxu0
    %112 = vdwg.mxu0
    %v113 = vadd.f32 %v50, %v107
    %v114 = vadd.f32 %v51, %v110
    %115 = vst [vmem:[#allocation2] sm:$0xff] %v113
    %116 = vst [vmem:[#allocation2 + $0x8] sm:$0xff] %v114
    // Predicated region
    $region22: #{tpu_custom_call.1} parent=1 // pred_check
      %p117 = pneg %p41
    $region23: #{tpu_custom_call.1} parent=1 // pred_check_branch
      %119 = sbr.rel (%p117) target = $region25
    $region24: #{tpu_custom_call.1} parent=1 // pred_region
      %v120 = vld [vmem:[#allocation2] sm:$0xff]
      %v121 = vld [vmem:[#allocation2 + $0x8] sm:$0xff]
      %v122 = vpack.c.bf16 %v121, %v120
      %v124 = vunpack.c.l.b16 %v122
      %v125 = vunpack.c.h.b16 %v122
      %v126 = vpack.c.b16 %v124, %v124
      %v127 = vpack.c.b16 %v125, %v125
      %130 = vst [vmem:[#allocation8] sm:$0xf] %v126
      %131 = vst [vmem:[#allocation8 + $0x4] sm:$0xf] %v127
    $region25: #{tpu_custom_call.1} parent=1 // pred_fallthru
      _
    // Predicated region
    $region26: #{tpu_custom_call.1} parent=1 // pred_check
      _
    $region27: #{tpu_custom_call.1} parent=1 // pred_check_branch
      %133 = sbr.rel (0) target = $region29
    $region28: #{tpu_custom_call.1} parent=1 // pred_region
      %s135 = ssub.s32 128, 128
      %136 = vsyncadd [#allocation5], %s135
      %s137 = sshll.u32 [#allocation8], 4
      %s138 = int_to_ptr.vmem [resolvable:$true] %s137
      %143 = dma.vmem_to_hbm [thread:$0]  %s138, 128, %s2, [#allocation5], 64, 64, 4
    $region29: #{tpu_custom_call.1} parent=1 // pred_fallthru
      _
    // Predicated region
    $region30: #{tpu_custom_call.1} parent=1 // pred_check
      _
    $region31: #{tpu_custom_call.1} parent=1 // pred_check_branch
      %145 = sbr.rel (0) target = $region33
    $region32: #{tpu_custom_call.1} parent=1 // pred_region
      %146 = dma.done [#allocation5], 128
    $region33: #{tpu_custom_call.1} parent=1 // pred_fallthru
      _
    %147 = vsyncpa [#allocation4], 1
    %148 = vsyncpa [#allocation7], 1
    %149 = vsyncpa [#allocation5], 1

</llo_original>
